<compile_context>
chip_gen: v7x
topology: tpu7x:2x2x1
jax: 0.10.0
libtpu: 0.0.40
codegen_flags: <defaults>
</compile_context>

<pallas_src>
import functools

import jax
import jax.numpy as jnp
from jax.experimental import pallas as pl
from jax.experimental.pallas import tpu as pltpu


def _pool_kernel(q_ref, vt_ref, f_ref, out_ref, *, neighbor_num: int):
    """One (batch, row-block) grid step.

    q_ref:   (tq, 3)  query vertices of this row tile
    vt_ref:  (3, N)   all vertices, channels-first (lane-dense), VMEM resident
    f_ref:   (N, C)   all features, kept in their input dtype in VMEM
    out_ref: (tq, C)  max over the K nearest neighbours' features
    """
    tq = q_ref.shape[0]
    n = vt_ref.shape[1]
    c = out_ref.shape[-1]

    q = q_ref[...].astype(jnp.float32)      # (tq, 3)   tiny
    vt = vt_ref[...].astype(jnp.float32)    # (3, N)    tiny

    # Pairwise squared distances: three broadcast-subtract-square passes on the
    # VPU (pure lane-dense work; no in-kernel transpose, no tiny-K matmul).
    dist = jnp.zeros((tq, n), jnp.float32)
    for d in range(3):                      # static, 3 coordinates
        diff = q[:, d:d + 1] - vt[d:d + 1, :]           # (tq, 1) - (1, N)
        dist = dist + diff * diff

    # Exclude self.  torch.topk(k+1)[..., 1:] drops the smallest entry, which
    # for non-degenerate point clouds is the zero self-distance; for exactly
    # coincident points the two conventions may pick a different (equally
    # close) neighbour.
    row0 = pl.program_id(1) * tq
    rows = jax.lax.broadcasted_iota(jnp.int32, (tq, n), 0) + row0
    cols = jax.lax.broadcasted_iota(jnp.int32, (tq, n), 1)
    inf = jnp.float32(jnp.inf)
    dist = jnp.where(rows == cols, inf, dist)

    f = f_ref[...]                          # stays in the input dtype (bf16 ok)

    def body(_, carry):
        d_cur, pooled = carry
        min_val = jnp.min(d_cur, axis=-1, keepdims=True)          # (tq, 1)
        is_min = d_cur == min_val
        # First occurrence of the per-row minimum via an index-min reduce
        # (reduce + compare instead of a lane-axis cumsum scan).
        cand = jnp.where(is_min, cols, n)
        first = cols == jnp.min(cand, axis=-1, keepdims=True)     # one-hot rows
        # One-hot MXU gather of the selected neighbour's features.  The one-hot
        # is exact in any dtype; bf16 operands are used when the feature map is
        # half precision (halves MXU time and vreg/VMEM traffic), f32 otherwise
        # so the result is bit-identical to the PyTorch module.
        sel = first.astype(f.dtype)
        gathered = jnp.dot(sel, f, preferred_element_type=jnp.float32)
        pooled = jnp.maximum(pooled, gathered)
        d_cur = jnp.where(first, inf, d_cur)                      # drop it
        return d_cur, pooled

    pooled0 = jnp.full((tq, c), -jnp.inf, jnp.float32)
    # fori_loop (instead of an unrolled Python loop) bounds the live set to one
    # iteration's (tq, N) temporaries.
    _, pooled = jax.lax.fori_loop(0, neighbor_num, body, (dist, pooled0))
    out_ref[...] = pooled.astype(out_ref.dtype)


def _choose_tile(n, target, granule):
    """Largest multiple of `granule` that divides `n` and is <= target (else n)."""
    if n <= target:
        return n
    t = (target // granule) * granule
    while t >= granule:
        if n % t == 0:
            return t
        t -= granule
    return n


def _row_tile(n, requested=None):
    if requested is not None:
        if n % requested != 0 or (requested % 8 != 0 and requested != n):
            raise ValueError(f"invalid row tile {requested} for n={n}")
        return requested
    # ~6 live (tq, N) f32 temporaries per row tile; keep them under ~24 MiB so
    # the whole working set (plus the resident (N, C) feature block) stays well
    # inside v7x's 64 MiB physical VMEM and the explicit limit set below.
    cap = (24 * 1024 * 1024) // max(1, 6 * 4 * n)
    cap = max(8, min(256, (cap // 8) * 8))
    return _choose_tile(n, cap, 8)


def neighbor_max_pool(vertices, feature_map, neighbor_num, *, row_tile=None):
    """pooled[b, i, :] = max over the K nearest neighbours j of feature[b, j, :].

    vertices:    (bs, N, 3), feature_map: (bs, N, C)  ->  (bs, N, C)
    """
    bs, n, d3 = vertices.shape
    if d3 != 3:
        raise ValueError("vertices must have shape (bs, N, 3)")
    c = feature_map.shape[-1]
    if not (1 <= neighbor_num <= n - 1):
        raise ValueError("need 1 <= neighbor_num <= N - 1")

    tq = _row_tile(n, row_tile)
    # Lane-dense (channels-first) copy of the vertices for the key side of the
    # distance computation; tiny, done once in plain JAX.
    vertices_t = jnp.transpose(vertices, (0, 2, 1))          # (bs, 3, N)

    kernel = functools.partial(_pool_kernel, neighbor_num=neighbor_num)
    return pl.pallas_call(
        kernel,
        out_shape=jax.ShapeDtypeStruct((bs, n, c), feature_map.dtype),
        grid_spec=pltpu.PrefetchScalarGridSpec(
            num_scalar_prefetch=0,
            grid=(bs, n // tq),
            in_specs=[
                # query vertices: one (tq, 3) block per row tile
                pl.BlockSpec((None, tq, 3), lambda b, r: (b, r, 0)),
                # all vertices, lane-dense; same block across row tiles
                pl.BlockSpec((None, 3, n), lambda b, r: (b, 0, 0)),
                # all features in their input dtype; same block across row tiles
                pl.BlockSpec((None, n, c), lambda b, r: (b, 0, 0)),
            ],
            out_specs=pl.BlockSpec((None, tq, c), lambda b, r: (b, r, 0)),
        ),
        compiler_params=pltpu.CompilerParams(
            # Both grid axes are independent -> shard across the two
            # TensorCores on v7x (megacore); harmless on v5e/v6e.
            dimension_semantics=("parallel", "parallel"),
            # Above the 16/32 MiB scoped defaults (v5e/v6e), below v7x's
            # 64 MiB physical VMEM.
            vmem_limit_bytes=48 * 1024 * 1024,
        ),
    )(vertices, vertices_t, feature_map)


def pool_layer_forward(vertices, feature_map, *, pooling_rate: int = 4,
                       neighbor_num: int = 4, sample_key=None):
    """JAX/Pallas equivalent of PoolLayer.forward.

    vertices:    (bs, vertice_num, 3)
    feature_map: (bs, vertice_num, C)
    Returns (vertices_pool: (bs, pool_num, 3), feature_map_pool: (bs, pool_num, C))
    """
    bs, vertice_num, _ = vertices.shape
    pooled_feature = neighbor_max_pool(vertices, feature_map, neighbor_num)

    pool_num = int(vertice_num / pooling_rate)
    if sample_key is None:
        sample_key = jax.random.PRNGKey(0)
    # torch.randperm(vertice_num)[:pool_num] -- deterministic here via PRNGKey.
    # TODO(synk): optionally fuse this row sub-sample (scalar-prefetched indices)
    # into the kernel so only pool_num rows are written back (4x less output
    # HBM traffic) and the stored slab is lane-dense when C < 128.
    sample_idx = jax.random.permutation(sample_key, vertice_num)[:pool_num]
    vertices_pool = vertices[:, sample_idx, :]
    feature_map_pool = pooled_feature[:, sample_idx, :]
    return vertices_pool, feature_map_pool


def _reference_pooled(vertices, feature_map, neighbor_num):
    """Pure-JAX reference of the neighbour max-pool (mirrors the PyTorch code)."""
    inner = jnp.einsum('bnd,bmd->bnm', vertices, vertices)
    quad = jnp.sum(vertices ** 2, axis=2)
    distance = inner * -2 + quad[:, None, :] + quad[:, :, None]
    _, idx = jax.lax.top_k(-distance, neighbor_num + 1)
    idx = idx[:, :, 1:]                                      # (bs, N, K)
    gathered = jnp.take_along_axis(feature_map[:, None, :, :],
                                   idx[..., None], axis=2)   # (bs, N, K, C)
    return jnp.max(gathered, axis=2)


if __name__ == "__main__":
    key = jax.random.PRNGKey(0)
    k_v, k_f, k_s = jax.random.split(key, 3)

    # --- small end-to-end check (matches the module's implied shapes) ---
    bs, n, c = 2, 16, 32
    pooling_rate, neighbor_num = 4, 4

    vertices = jax.random.normal(k_v, (bs, n, 3), dtype=jnp.float32)
    feature_map = jax.random.normal(k_f, (bs, n, c), dtype=jnp.float32)

    v_pool, f_pool = pool_layer_forward(
        vertices, feature_map,
        pooling_rate=pooling_rate, neighbor_num=neighbor_num, sample_key=k_s)
    jax.block_until_ready((v_pool, f_pool))
    assert v_pool.shape == (bs, n // pooling_rate, 3)
    assert f_pool.shape == (bs, n // pooling_rate, c)

    pooled_kernel = neighbor_max_pool(vertices, feature_map, neighbor_num)
    pooled_ref = _reference_pooled(vertices, feature_map, neighbor_num)
    assert jnp.allclose(pooled_kernel, pooled_ref, atol=1e-5, rtol=1e-5), (
        float(jnp.max(jnp.abs(pooled_kernel - pooled_ref))))

    # --- larger, row-tiled case (exercises the (bs, N // tq) grid) ---
    n2, c2 = 256, 64
    vertices2 = jax.random.normal(jax.random.PRNGKey(1), (bs, n2, 3), jnp.float32)
    features2 = jax.random.normal(jax.random.PRNGKey(2), (bs, n2, c2), jnp.float32)
    pooled2 = neighbor_max_pool(vertices2, features2, neighbor_num, row_tile=128)
    ref2 = _reference_pooled(vertices2, features2, neighbor_num)
    assert jnp.allclose(pooled2, ref2, atol=1e-5, rtol=1e-5), (
        float(jnp.max(jnp.abs(pooled2 - ref2))))

    # --- bf16 feature path (bf16 one-hot MXU gather; exact w.r.t. bf16 inputs) ---
    features_bf16 = features2.astype(jnp.bfloat16)
    pooled_bf16 = neighbor_max_pool(vertices2, features_bf16, neighbor_num,
                                    row_tile=128)
    ref_bf16 = _reference_pooled(vertices2,
                                 features_bf16.astype(jnp.float32), neighbor_num)
    assert jnp.allclose(pooled_bf16.astype(jnp.float32), ref_bf16,
                        atol=1e-5, rtol=1e-5), (
        float(jnp.max(jnp.abs(pooled_bf16.astype(jnp.float32) - ref_bf16))))

    jax.block_until_ready((pooled_kernel, pooled2, pooled_bf16))
    print("KERNEL_OK")
</pallas_src>

<mosaic_0001>
module attributes {stable_mosaic.version = 11 : i64} {
  func.func @_pool_kernel(%arg0: i32, %arg1: i32, %arg2: memref<1x16x3xf32, #tpu.memory_space<vmem>>, %arg3: memref<1x3x16xf32, #tpu.memory_space<vmem>>, %arg4: memref<1x16x32xf32, #tpu.memory_space<vmem>>, %arg5: memref<1x16x32xf32, #tpu.memory_space<vmem>>) attributes {dimension_semantics = [#tpu.dimension_semantics<parallel>, #tpu.dimension_semantics<parallel>], iteration_bounds = array<i64: 2, 1>, scalar_prefetch = 0 : i64, scratch_operands = 0 : i64, tpu.core_type = #tpu.core_type<tc>, window_params = [{transform_indices = @transform_0, window_bounds = array<i64: 1, 16, 3>}, {transform_indices = @transform_1, window_bounds = array<i64: 1, 3, 16>}, {transform_indices = @transform_2, window_bounds = array<i64: 1, 16, 32>}, {transform_indices = @transform_3, window_bounds = array<i64: 1, 16, 32>}]} {
    %c0 = arith.constant 0 : index
    %c0_0 = arith.constant 0 : index
    %c0_1 = arith.constant 0 : index
    %0 = vector.load %arg2[%c0, %c0_0, %c0_1] : memref<1x16x3xf32, #tpu.memory_space<vmem>>, vector<1x16x3xf32>
    %1 = vector.shape_cast %0 : vector<1x16x3xf32> to vector<16x3xf32>
    %c0_2 = arith.constant 0 : index
    %c0_3 = arith.constant 0 : index
    %c0_4 = arith.constant 0 : index
    %2 = vector.load %arg3[%c0_2, %c0_3, %c0_4] : memref<1x3x16xf32, #tpu.memory_space<vmem>>, vector<1x3x16xf32>
    %3 = vector.shape_cast %2 : vector<1x3x16xf32> to vector<3x16xf32>
    %cst = arith.constant 0.000000e+00 : f32
    %4 = vector.broadcast %cst : f32 to vector<16x16xf32>
    %5 = vector.extract_strided_slice %1 {offsets = [0, 0], sizes = [16, 1], strides = [1, 1]} : vector<16x3xf32> to vector<16x1xf32>
    %6 = vector.extract_strided_slice %3 {offsets = [0, 0], sizes = [1, 16], strides = [1, 1]} : vector<3x16xf32> to vector<1x16xf32>
    %7 = vector.broadcast %5 : vector<16x1xf32> to vector<16x16xf32>
    %8 = vector.broadcast %6 : vector<1x16xf32> to vector<16x16xf32>
    %9 = arith.subf %7, %8 : vector<16x16xf32>
    %10 = arith.mulf %9, %9 : vector<16x16xf32>
    %11 = arith.addf %4, %10 : vector<16x16xf32>
    %12 = vector.extract_strided_slice %1 {offsets = [0, 1], sizes = [16, 1], strides = [1, 1]} : vector<16x3xf32> to vector<16x1xf32>
    %13 = vector.extract_strided_slice %3 {offsets = [1, 0], sizes = [1, 16], strides = [1, 1]} : vector<3x16xf32> to vector<1x16xf32>
    %14 = vector.broadcast %12 : vector<16x1xf32> to vector<16x16xf32>
    %15 = vector.broadcast %13 : vector<1x16xf32> to vector<16x16xf32>
    %16 = arith.subf %14, %15 : vector<16x16xf32>
    %17 = arith.mulf %16, %16 : vector<16x16xf32>
    %18 = arith.addf %11, %17 : vector<16x16xf32>
    %19 = vector.extract_strided_slice %1 {offsets = [0, 2], sizes = [16, 1], strides = [1, 1]} : vector<16x3xf32> to vector<16x1xf32>
    %20 = vector.extract_strided_slice %3 {offsets = [2, 0], sizes = [1, 16], strides = [1, 1]} : vector<3x16xf32> to vector<1x16xf32>
    %21 = vector.broadcast %19 : vector<16x1xf32> to vector<16x16xf32>
    %22 = vector.broadcast %20 : vector<1x16xf32> to vector<16x16xf32>
    %23 = arith.subf %21, %22 : vector<16x16xf32>
    %24 = arith.mulf %23, %23 : vector<16x16xf32>
    %25 = arith.addf %18, %24 : vector<16x16xf32>
    %c16_i32 = arith.constant 16 : i32
    %26 = arith.muli %arg1, %c16_i32 : i32
    %27 = tpu.iota {dimensions = array<i32: 0>} : vector<16x16xi32>
    %28 = vector.broadcast %26 : i32 to vector<16x16xi32>
    %29 = arith.addi %27, %28 : vector<16x16xi32>
    %30 = tpu.iota {dimensions = array<i32: 1>} : vector<16x16xi32>
    %31 = arith.cmpi eq, %29, %30 : vector<16x16xi32>
    %cst_5 = arith.constant 0x7F800000 : f32
    %32 = vector.broadcast %cst_5 : f32 to vector<16x16xf32>
    %33 = arith.select %31, %32, %25 : vector<16x16xi1>, vector<16x16xf32>
    %c0_6 = arith.constant 0 : index
    %c0_7 = arith.constant 0 : index
    %c0_8 = arith.constant 0 : index
    %34 = vector.load %arg4[%c0_6, %c0_7, %c0_8] : memref<1x16x32xf32, #tpu.memory_space<vmem>>, vector<1x16x32xf32>
    %35 = vector.shape_cast %34 : vector<1x16x32xf32> to vector<16x32xf32>
    %cst_9 = arith.constant 0xFF800000 : f32
    %36 = vector.broadcast %cst_9 : f32 to vector<16x32xf32>
    %cst_10 = arith.constant 0x7F800000 : f32
    %c0_i32 = arith.constant 0 : i32
    %c4_i32 = arith.constant 4 : i32
    %37 = arith.addi %c0_i32, %c4_i32 : i32
    %c1_i32 = arith.constant 1 : i32
    %38:2 = scf.for %arg6 = %c0_i32 to %37 step %c1_i32 iter_args(%arg7 = %33, %arg8 = %36) -> (vector<16x16xf32>, vector<16x32xf32>)  : i32 {
      %cst_14 = arith.constant dense<0x7F800000> : vector<16xf32>
      %42 = vector.multi_reduction <minimumf>, %arg7, %cst_14 [1] : vector<16x16xf32> to vector<16xf32>
      %43 = vector.shape_cast %42 : vector<16xf32> to vector<16x1xf32>
      %44 = vector.broadcast %43 : vector<16x1xf32> to vector<16x16xf32>
      %45 = arith.cmpf oeq, %arg7, %44 : vector<16x16xf32>
      %c16_i32_15 = arith.constant 16 : i32
      %46 = vector.broadcast %c16_i32_15 : i32 to vector<16x16xi32>
      %47 = arith.select %45, %30, %46 : vector<16x16xi1>, vector<16x16xi32>
      %cst_16 = arith.constant dense<2147483647> : vector<16xi32>
      %48 = vector.multi_reduction <minsi>, %47, %cst_16 [1] : vector<16x16xi32> to vector<16xi32>
      %49 = vector.shape_cast %48 : vector<16xi32> to vector<16x1xi32>
      %50 = vector.broadcast %49 : vector<16x1xi32> to vector<16x16xi32>
      %51 = arith.cmpi eq, %30, %50 : vector<16x16xi32>
      %52 = arith.extui %51 : vector<16x16xi1> to vector<16x16xi32>
      %53 = arith.sitofp %52 : vector<16x16xi32> to vector<16x16xf32>
      %cst_17 = arith.constant dense<0.000000e+00> : vector<16x32xf32>
      %54 = tpu.matmul %53, %35, %cst_17 {dimension_numbers = #tpu.dot_dimension_numbers<[1], [0], [0], [1], [0, 0, 1, 1], [], []>} : vector<16x16xf32>, vector<16x32xf32>, vector<16x32xf32> -> vector<16x32xf32>
      %55 = arith.maximumf %arg8, %54 : vector<16x32xf32>
      %56 = vector.broadcast %cst_10 : f32 to vector<16x16xf32>
      %57 = arith.select %51, %56, %arg7 : vector<16x16xi1>, vector<16x16xf32>
      scf.yield %57, %55 : vector<16x16xf32>, vector<16x32xf32>
    }
    %c0_11 = arith.constant 0 : index
    %c0_12 = arith.constant 0 : index
    %c0_13 = arith.constant 0 : index
    %39 = vector.load %arg5[%c0_11, %c0_12, %c0_13] : memref<1x16x32xf32, #tpu.memory_space<vmem>>, vector<1x16x32xf32>
    %40 = vector.shape_cast %39 : vector<1x16x32xf32> to vector<16x32xf32>
    %41 = vector.shape_cast %38#1 : vector<16x32xf32> to vector<1x16x32xf32>
    tpu.vector_store %arg5[%c0_11, %c0_12, %c0_13], %41 {strides = array<i32>} : memref<1x16x32xf32, #tpu.memory_space<vmem>>, vector<1x16x32xf32>,
    return
  }
  func.func @transform_0(%arg0: i32, %arg1: i32) -> (i32, i32, i32) {
    %c0_i32 = arith.constant 0 : i32
    %c0_i32_0 = arith.constant 0 : i32
    return %arg0, %arg1, %c0_i32 : i32, i32, i32
  }
  func.func @transform_1(%arg0: i32, %arg1: i32) -> (i32, i32, i32) {
    %c0_i32 = arith.constant 0 : i32
    %c0_i32_0 = arith.constant 0 : i32
    %c0_i32_1 = arith.constant 0 : i32
    return %arg0, %c0_i32, %c0_i32_0 : i32, i32, i32
  }
  func.func @transform_2(%arg0: i32, %arg1: i32) -> (i32, i32, i32) {
    %c0_i32 = arith.constant 0 : i32
    %c0_i32_0 = arith.constant 0 : i32
    %c0_i32_1 = arith.constant 0 : i32
    return %arg0, %c0_i32, %c0_i32_0 : i32, i32, i32
  }
  func.func @transform_3(%arg0: i32, %arg1: i32) -> (i32, i32, i32) {
    %c0_i32 = arith.constant 0 : i32
    %c0_i32_0 = arith.constant 0 : i32
    return %arg0, %arg1, %c0_i32 : i32, i32, i32
  }
}

</mosaic_0001>

<llo_original>
// kernel: tpu_custom_call.1
$region0: #{tpu_custom_call.1}
  #allocation0 [shape = 'u32[]', space=smem, size = 0x4, offset = 0x4, fixed_abs, tag = 'smem constant byte address 0x4 - core index']
  #allocation1 [shape = 'u32[144,128]{1,0:T(1,128)}', space=vmem, size = 0x12000, scoped, tag = 'internal scratch']
  %s0 = inlined_call_operand.vmem [shape: f32[2,16,3], index: 0, kind: input, shape index: {}]
  %s1 = inlined_call_operand.vmem [shape: f32[2,3,16], index: 1, kind: input, shape index: {}]
  %s2 = inlined_call_operand.vmem [shape: f32[2,16,32], index: 2, kind: input, shape index: {}]
  %s3 = inlined_call_operand.hbm [shape: f32[2,16,32], index: 3, kind: output, shape index: {}]
  %s4 = sld [smem:[#allocation0]]
  $region52: #{tpu_custom_call.1} parent=0
    _
  %s6 = ssub.s32 1, %s4
  %s7 = scalar_select 0, %s6, %s4
  $region1: #{tpu_custom_call.1} parent=0
    #allocation2 [shape = 'u8[16384]{0}', space=vmem, size = 0x4000, scoped, tag = 'output window, operand 0']
    #allocation3 [shape = 's32[2]{0}', space=sflag, size = 0x8, scoped, tag = 'scoped memory for tpu_custom_call.1']
    %8 = vsyncpa [#allocation3], 0
    %s9 = scalar_lea.sflag [#allocation3], 1
    %10 = vsyncpa %s9, 0
    loop: start=0, step=1, limit=4
    $region2: #{tpu_custom_call.1} parent=1 // loop_pre_header
      _
    $region3: #{tpu_custom_call.1} parent=1 // loop_header
      %s12 = sphi 0, %s16
      %p13 = scmp.ge.s32.totalorder %s12, 4
      %s19 = sphi 0, %s31
      %s20 = sphi 0, %s27
      %s21 = sphi 0, %s19
      %s22 = sphi 0, %s20
      %s23 = sphi 0, %s21
      %s24 = sphi 0, %s22
      %s36 = sphi 0, %s38
      %s39 = sphi 0, %s36
      %s40 = sphi 0, %s39
      %s56 = sphi 0, %s40
      %s62 = sphi 0, %s64
      %s65 = sphi 0, %s62
      %s66 = sphi 0, %s65
      %s82 = sphi 0, %s66
      %s88 = sphi 0, %s90
      %s91 = sphi 0, %s88
      %s92 = sphi 0, %s91
      %s108 = sphi 0, %s92
      %s116 = sphi 0, %s118
      %s119 = sphi 0, %s116
      %s120 = sphi 0, %s119
      %s136 = sphi 0, %s120
    $region4: #{tpu_custom_call.1} parent=1 // loop_header_branch
      %15 = sbr.rel (%p13) target = $region8
    $region5: #{tpu_custom_call.1} parent=1 // loop_body
      %s17 = ssub.s32 %s12, 1
      %s18 = ssub.s32 %s12, 2
      %s25 = sadd.s32 1, %s20
      %p26 = scmp.ge.s32.totalorder %s25, 1
      %s27 = scalar_select %p26, 0, %s25
      %s28 = sadd.s32 1, %s19
      %s29 = scalar_select %p26, %s28, %s19
      %p30 = scmp.ge.s32.totalorder %s29, 2
      %s31 = scalar_select %p30, 0, %s29
      %s32 = ssub.s32 %s19, %s31
      %s33 = ssub.s32 %s20, %s27
      %s34 = sor.u32 %s32, %s33
      %p35 = scmp.eq.s32.totalorder %s34, 0
      %s37 = sadd.s32 %s36, 1
      %s38 = scalar_select %p35, %s36, %s37
      %p41 = pneg %p35
      %p42 = scmp.eq.s32.totalorder %s12, 1
      %p43 = por %p41, %p42
      %p44 = scmp.ne.s32.totalorder %s36, %s39
      %p45 = scmp.eq.s32.totalorder %s12, 0
      %p46 = por %p44, %p45
      %p47 = scmp.ne.s32.totalorder %s36, %s39
      %p48 = scmp.eq.s32.totalorder %s17, 1
      %p49 = por %p47, %p48
      %p50 = scmp.ne.s32.totalorder %s39, %s40
      %p51 = scmp.eq.s32.totalorder %s17, 0
      %p52 = por %p50, %p51
      %p53 = scmp.ne.s32.totalorder %s39, %s40
      %p54 = scmp.eq.s32.totalorder %s18, 1
      %p55 = por %p53, %p54
      %p57 = scmp.ne.s32.totalorder %s40, %s56
      %p58 = scmp.eq.s32.totalorder %s18, 0
      %p59 = por %p57, %p58
      %s60 = ssub.s32 %s19, %s31
      %p61 = scmp.eq.s32.totalorder %s60, 0
      %s63 = sadd.s32 %s62, 1
      %s64 = scalar_select %p61, %s62, %s63
      %p67 = pneg %p61
      %p68 = scmp.eq.s32.totalorder %s12, 1
      %p69 = por %p67, %p68
      %p70 = scmp.ne.s32.totalorder %s62, %s65
      %p71 = scmp.eq.s32.totalorder %s12, 0
      %p72 = por %p70, %p71
      %p73 = scmp.ne.s32.totalorder %s62, %s65
      %p74 = scmp.eq.s32.totalorder %s17, 1
      %p75 = por %p73, %p74
      %p76 = scmp.ne.s32.totalorder %s65, %s66
      %p77 = scmp.eq.s32.totalorder %s17, 0
      %p78 = por %p76, %p77
      %p79 = scmp.ne.s32.totalorder %s65, %s66
      %p80 = scmp.eq.s32.totalorder %s18, 1
      %p81 = por %p79, %p80
      %p83 = scmp.ne.s32.totalorder %s66, %s82
      %p84 = scmp.eq.s32.totalorder %s18, 0
      %p85 = por %p83, %p84
      %s86 = ssub.s32 %s19, %s31
      %p87 = scmp.eq.s32.totalorder %s86, 0
      %s89 = sadd.s32 %s88, 1
      %s90 = scalar_select %p87, %s88, %s89
      %p93 = pneg %p87
      %p94 = scmp.eq.s32.totalorder %s12, 1
      %p95 = por %p93, %p94
      %p96 = scmp.ne.s32.totalorder %s88, %s91
      %p97 = scmp.eq.s32.totalorder %s12, 0
      %p98 = por %p96, %p97
      %p99 = scmp.ne.s32.totalorder %s88, %s91
      %p100 = scmp.eq.s32.totalorder %s17, 1
      %p101 = por %p99, %p100
      %p102 = scmp.ne.s32.totalorder %s91, %s92
      %p103 = scmp.eq.s32.totalorder %s17, 0
      %p104 = por %p102, %p103
      %p105 = scmp.ne.s32.totalorder %s91, %s92
      %p106 = scmp.eq.s32.totalorder %s18, 1
      %p107 = por %p105, %p106
      %p109 = scmp.ne.s32.totalorder %s92, %s108
      %p110 = scmp.eq.s32.totalorder %s18, 0
      %p111 = por %p109, %p110
      %s112 = ssub.s32 %s19, %s31
      %s113 = ssub.s32 %s20, %s27
      %s114 = sor.u32 %s112, %s113
      %p115 = scmp.eq.s32.totalorder %s114, 0
      %s117 = sadd.s32 %s116, 1
      %s118 = scalar_select %p115, %s116, %s117
      %p121 = pneg %p115
      %p122 = scmp.eq.s32.totalorder %s12, 1
      %p123 = por %p121, %p122
      %p124 = scmp.ne.s32.totalorder %s116, %s119
      %p125 = scmp.eq.s32.totalorder %s12, 0
      %p126 = por %p124, %p125
      %p127 = scmp.ne.s32.totalorder %s116, %s119
      %p128 = scmp.eq.s32.totalorder %s17, 1
      %p129 = por %p127, %p128
      %p130 = scmp.ne.s32.totalorder %s119, %s120
      %p131 = scmp.eq.s32.totalorder %s17, 0
      %p132 = por %p130, %p131
      %p133 = scmp.ne.s32.totalorder %s119, %s120
      %p134 = scmp.eq.s32.totalorder %s18, 1
      %p135 = por %p133, %p134
      %p137 = scmp.ne.s32.totalorder %s120, %s136
      %p138 = scmp.eq.s32.totalorder %s18, 0
      %p139 = por %p137, %p138
      %p140 = scmp.le.s32.totalorder 1, %s12
      %p141 = scmp.lt.s32.totalorder %s12, 3
      %p142 = pnand %p140, %p141
      %p143 = pneg %p142
      // Predicated region
      $region9: #{tpu_custom_call.1} parent=5 // pred_check
        _
      $region10: #{tpu_custom_call.1} parent=5 // pred_check_branch
        %145 = sbr.rel (%p142) target = $region12
      $region11: #{tpu_custom_call.1} parent=5 // pred_region
        %s146 = ssub.s32 %s12, 1
      $region12: #{tpu_custom_call.1} parent=5 // pred_fallthru
        _
      %p147 = scmp.lt.s32.totalorder %s12, 2
      // Predicated region
      $region13: #{tpu_custom_call.1} parent=5 // pred_check
        %p148 = pneg %p147
      $region14: #{tpu_custom_call.1} parent=5 // pred_check_branch
        %150 = sbr.rel (%p148) target = $region16
      $region15: #{tpu_custom_call.1} parent=5 // pred_region
        // Predicated region
        $region17: #{tpu_custom_call.1} parent=15 // pred_check
          %p151 = pneg %p46
        $region18: #{tpu_custom_call.1} parent=15 // pred_check_branch
          %153 = sbr.rel (%p151) target = $region20
        $region19: #{tpu_custom_call.1} parent=15 // pred_region
          %s154 = smul.u32 2, %s20
          %p155 = scmp.lt.s32.totalorder %s19, 1
          %s156 = scalar_select %p155, %s19, 1
          %p157 = scmp.lt.s32.totalorder %s154, 1
          %s158 = scalar_select %p157, %s154, 1
          %s159 = smul.addr %s156, 2
          %s160 = sadd.s32 %s158, %s159
          %s161 = smul.addr %s160, 8
          %s162 = scalar_lea.vmem %s0, %s161
          %s163 = smul.u32 2, %s20
        $region20: #{tpu_custom_call.1} parent=15 // pred_fallthru
          _
        // Predicated region
        $region21: #{tpu_custom_call.1} parent=15 // pred_check
          %p164 = pneg %p72
        $region22: #{tpu_custom_call.1} parent=15 // pred_check_branch
          %166 = sbr.rel (%p164) target = $region24
        $region23: #{tpu_custom_call.1} parent=15 // pred_region
          %p167 = scmp.lt.s32.totalorder %s19, 1
          %s168 = scalar_select %p167, %s19, 1
          %s169 = smul.addr %s168, 4
          %s170 = scalar_lea.vmem %s1, %s169
        $region24: #{tpu_custom_call.1} parent=15 // pred_fallthru
          _
        // Predicated region
        $region25: #{tpu_custom_call.1} parent=15 // pred_check
          %p171 = pneg %p98
        $region26: #{tpu_custom_call.1} parent=15 // pred_check_branch
          %173 = sbr.rel (%p171) target = $region28
        $region27: #{tpu_custom_call.1} parent=15 // pred_region
          %p174 = scmp.lt.s32.totalorder %s19, 1
          %s175 = scalar_select %p174, %s19, 1
          %s176 = smul.addr %s175, 2
          %s177 = smul.addr %s176, 8
          %s178 = scalar_lea.vmem %s2, %s177
        $region28: #{tpu_custom_call.1} parent=15 // pred_fallthru
          _
      $region16: #{tpu_custom_call.1} parent=5 // pred_fallthru
        _
      %p179 = scmp.le.s32.totalorder 1, %s12
      %p180 = scmp.lt.s32.totalorder %s12, 3
      %p181 = pnand %p179, %p180
      %p182 = pneg %p181
      // Predicated region
      $region29: #{tpu_custom_call.1} parent=5 // pred_check
        _
      $region30: #{tpu_custom_call.1} parent=5 // pred_check_branch
        %184 = sbr.rel (%p181) target = $region32
      $region31: #{tpu_custom_call.1} parent=5 // pred_region
        %s185 = ssub.s32 %s12, 1
        %s186 = smul.u32 2, %s22
        %p187 = scmp.lt.s32.totalorder %s21, 1
        %s188 = scalar_select %p187, %s21, 1
        %p189 = scmp.lt.s32.totalorder %s186, 1
        %s190 = scalar_select %p189, %s186, 1
        %s191 = smul.addr %s188, 2
        %s192 = sadd.s32 %s190, %s191
        %s193 = smul.addr %s192, 8
        %s194 = scalar_lea.vmem %s0, %s193
        %p195 = pneg %p52
        %p196 = pneg %p49
        %p197 = scmp.lt.s32.totalorder %s21, 1
        %s198 = scalar_select %p197, %s21, 1
        %s199 = smul.addr %s198, 4
        %s200 = scalar_lea.vmem %s1, %s199
        %p201 = pneg %p78
        %p202 = pneg %p75
        %p203 = scmp.lt.s32.totalorder %s21, 1
        %s204 = scalar_select %p203, %s21, 1
        %s205 = smul.addr %s204, 2
        %s206 = smul.addr %s205, 8
        %s207 = scalar_lea.vmem %s2, %s206
        %p208 = pneg %p104
        %p209 = pneg %p101
        %p210 = pneg %p132
        %p211 = pneg %p129
        %s212 = sand.u32 %s119, 1
        %s213 = scalar_lea.sflag [#allocation3], %s212
        %s214 = sand.u32 %s119, 1
        %s215 = smul.addr %s214, 16
        %s216 = scalar_lea.vmem [#allocation2], %s215
        %s217 = smul.u32 2, %s22
        %p218 = scmp.lt.s32.totalorder %s21, 1
        %s219 = scalar_select %p218, %s21, 1
        %p220 = scmp.lt.s32.totalorder %s217, 1
        %s221 = scalar_select %p220, %s217, 1
        %s222 = smul.addr %s219, 2
        %s223 = sadd.s32 %s221, %s222
        %s224 = smul.addr %s223, 8
        %s225 = scalar_lea.vmem %s0, %s224
        %s226 = smul.u32 2, %s22
        %p227 = scmp.lt.s32.totalorder %s21, 1
        %s228 = scalar_select %p227, %s21, 1
        %s229 = smul.addr %s228, 4
        %s230 = scalar_lea.vmem %s1, %s229
        %p231 = scmp.lt.s32.totalorder %s21, 1
        %s232 = scalar_select %p231, %s21, 1
        %s233 = smul.addr %s232, 2
        %s234 = smul.addr %s233, 8
        %s235 = scalar_lea.vmem %s2, %s234
        %s236 = smul.u32 2, %s22
        %v237 = vld [vmem:[%s225] sm:$0xff]
        %v238 = vld [vmem:[%s225 + $0x8] sm:$0xff]
        %v239 = vld [vmem:[%s230] sm:$0x7]
        %241 = vset.pattern.permute.xlu0 0
        %242 = vperm.xlu0 %241, %v237
        %v243 = vpop.permute.xlu0 %242
        %246 = vset.pattern.permute.xlu0 0
        %247 = vperm.xlu0 %246, %v238
        %v248 = vpop.permute.xlu0 %247
        %v250 = vlaneseq
        %v251 = vshrl.u32 %v250, 7
        %v252 = vsub.s32 0, %v251
        %v253 = vrot.slane %v239, %v252
        %v254 = vsub.f32 %v243, %v253
        %v255 = vsub.f32 %v248, %v253
        %v256 = vmul.f32 %v254, %v254
        %v257 = vmul.f32 %v255, %v255
        %v258 = vadd.f32 %v256, 0.0
        %v259 = vadd.f32 %v257, 0.0
        %260 = vset.pattern.permute.xlu0 1
        %261 = vperm.xlu0 %260, %v237
        %v262 = vpop.permute.xlu0 %261
        %264 = vset.pattern.permute.xlu0 1
        %265 = vperm.xlu0 %264, %v238
        %v266 = vpop.permute.xlu0 %265
        %v268 = vlaneseq
        %v269 = vshrl.u32 %v268, 7
        %v270 = vsub.s32 1, %v269
        %v271 = vrot.slane %v239, %v270
        %v272 = vsub.f32 %v262, %v271
        %v273 = vsub.f32 %v266, %v271
        %v274 = vmul.f32 %v272, %v272
        %v275 = vmul.f32 %v273, %v273
        %v276 = vadd.f32 %v258, %v274
        %v277 = vadd.f32 %v259, %v275
        %278 = vset.pattern.permute.xlu0 2
        %279 = vperm.xlu0 %278, %v237
        %v280 = vpop.permute.xlu0 %279
        %282 = vset.pattern.permute.xlu0 2
        %283 = vperm.xlu0 %282, %v238
        %v284 = vpop.permute.xlu0 %283
        %v286 = vlaneseq
        %v287 = vshrl.u32 %v286, 7
        %v288 = vsub.s32 2, %v287
        %v289 = vrot.slane %v239, %v288
        %v290 = vsub.f32 %v280, %v289
        %v291 = vsub.f32 %v284, %v289
        %v292 = vmul.f32 %v290, %v290
        %v293 = vmul.f32 %v291, %v291
        %v294 = vadd.f32 %v276, %v292
        %v295 = vadd.f32 %v277, %v293
        %s296 = smul.u32 %s22, 16
        %v297 = vlaneseq
        %v298 = vshrl.u32 %v297, 7
        %v299 = vadd.s32 %v298, 8
        %v300 = vstv %s296
        %v301 = vadd.s32 %v298, %v300
        %v302 = vadd.s32 %v299, %v300
        %v303 = vlaneseq
        %v304 = vand.u32 %v303, 127
        %vm305 = vcmp.eq.s32.totalorder %v301, %v304
        %vm306 = vcmp.eq.s32.totalorder %v302, %v304
        %v307 = vsel %vm305, inf, %v294
        %v308 = vsel %vm306, inf, %v295
        %v309 = vld [vmem:[%s235] sm:$0xff]
        %v310 = vld [vmem:[%s235 + $0x8] sm:$0xff]
        loop: start=0, step=1, limit=4
        $region33: #{tpu_custom_call.1} parent=31 // loop_pre_header
          _
        $region34: #{tpu_custom_call.1} parent=31 // loop_header
          %s312 = sphi 0, %s316
          %p313 = scmp.ge.s32.totalorder %s312, 4
          %v317 = vphi %v307, %v451
          %v318 = vphi %v308, %v452
          %v319 = vphi -inf, %v449
          %v320 = vphi -inf, %v450
        $region35: #{tpu_custom_call.1} parent=31 // loop_header_branch
          %315 = sbr.rel (%p313) target = $region39
        $region36: #{tpu_custom_call.1} parent=31 // loop_body
          %vm321 = vcmask 130048
          %v322 = vsel %vm321, %v317, inf
          %323 = vmin.xlane.f32.xlu0 %v322
          %v324 = vpop.xlane.xlu0 %323
          %v325 = vsel %vm321, %v318, inf
          %326 = vmin.xlane.f32.xlu0 %v325
          %v327 = vpop.xlane.xlu0 %326
          %vm328 = vcmp.eq.f32.partialorder %v317, %v324
          %vm329 = vcmp.eq.f32.partialorder %v318, %v327
          %v330 = vsel %vm328, %v304, 16
          %v331 = vsel %vm329, %v304, 16
          %v332 = vsel %vm321, %v330, 2147483647
          %v333 = vand.u32 %v332, 65535
          %v334 = vshra.s32 %v332, 16
          %v335 = vcvt.s32.f32 %v333
          %v336 = vcvt.s32.f32 %v334
          %337 = vmin.xlane.f32.xlu0 %v336
          %v338 = vpop.xlane.xlu0 %337
          %vm339 = vcmp.eq.f32.partialorder %v336, %v338
          %v340 = vsel %vm339, %v335, inf
          %341 = vmin.xlane.f32.xlu0 %v340
          %v342 = vpop.xlane.xlu0 %341
          %v343 = vcvt.f32.s32 %v342
          %v344 = vcvt.f32.s32 %v338
          %v345 = vshll.u32 %v344, 16
          %v346 = vadd.s32 %v345, %v343
          %v347 = vsel %vm321, %v331, 2147483647
          %v348 = vand.u32 %v347, 65535
          %v349 = vshra.s32 %v347, 16
          %v350 = vcvt.s32.f32 %v348
          %v351 = vcvt.s32.f32 %v349
          %352 = vmin.xlane.f32.xlu0 %v351
          %v353 = vpop.xlane.xlu0 %352
          %vm354 = vcmp.eq.f32.partialorder %v351, %v353
          %v355 = vsel %vm354, %v350, inf
          %356 = vmin.xlane.f32.xlu0 %v355
          %v357 = vpop.xlane.xlu0 %356
          %v358 = vcvt.f32.s32 %v357
          %v359 = vcvt.f32.s32 %v353
          %v360 = vshll.u32 %v359, 16
          %v361 = vadd.s32 %v360, %v358
          %vm362 = vcmp.eq.s32.totalorder %v304, %v346
          %vm363 = vcmp.eq.s32.totalorder %v304, %v361
          %v364 = vsel %vm362, 1, 0
          %v365 = vsel %vm363, 1, 0
          %v366 = vcvt.s32.f32 %v364
          %v367 = vcvt.s32.f32 %v365
          %v369 = vsel %vm321, %v366, 0
          %v372 = vsel %vm321, %v367, 0
          %374 = vmatprep.subr.mxu0 0.0
          %375 = vmatpush1.msra.mxu0 %v309
          %376 = vmatprep.subr.mxu0 0.0
          %377 = vmatpush1.msra.mxu0 %v310
          %378 = vmatprep.subr.mxu0 0.0
          %379 = vmatpush1.msra.mxu0 0.0
          %380 = vmatprep.subr.mxu0 0.0
          %381 = vmatpush1.msra.mxu0 0.0
          %382 = vmatprep.subr.mxu0 0.0
          %383 = vmatpush1.msra.mxu0 0.0
          %384 = vmatprep.subr.mxu0 0.0
          %385 = vmatpush1.msra.mxu0 0.0
          %386 = vmatprep.subr.mxu0 0.0
          %387 = vmatpush1.msra.mxu0 0.0
          %388 = vmatprep.subr.mxu0 0.0
          %389 = vmatpush1.msra.mxu0 0.0
          %390 = vmatprep.subr.mxu0 0.0
          %391 = vmatpush1.msra.mxu0 0.0
          %392 = vmatprep.subr.mxu0 0.0
          %393 = vmatpush1.msra.mxu0 0.0
          %394 = vmatprep.subr.mxu0 0.0
          %395 = vmatpush1.msra.mxu0 0.0
          %396 = vmatprep.subr.mxu0 0.0
          %397 = vmatpush1.msra.mxu0 0.0
          %398 = vmatprep.subr.mxu0 0.0
          %399 = vmatpush1.msra.mxu0 0.0
          %400 = vmatprep.subr.mxu0 0.0
          %401 = vmatpush1.msra.mxu0 0.0
          %402 = vmatprep.subr.mxu0 0.0
          %403 = vmatpush1.msra.mxu0 0.0
          %404 = vmatprep.subr.mxu0 0.0
          %405 = vmatpush1.msra.mxu0 0.0
          %406 = vmatprep.subr.mxu0 0.0
          %407 = vmatpush1.msra.mxu0 0.0
          %408 = vmatprep.subr.mxu0 0.0
          %409 = vmatpush1.msra.mxu0 0.0
          %410 = vmatprep.subr.mxu0 0.0
          %411 = vmatpush1.msra.mxu0 0.0
          %412 = vmatprep.subr.mxu0 0.0
          %413 = vmatpush1.msra.mxu0 0.0
          %414 = vmatprep.subr.mxu0 0.0
          %415 = vmatpush1.msra.mxu0 0.0
          %416 = vmatprep.subr.mxu0 0.0
          %417 = vmatpush1.msra.mxu0 0.0
          %418 = vmatprep.subr.mxu0 0.0
          %419 = vmatpush1.msra.mxu0 0.0
          %420 = vmatprep.subr.mxu0 0.0
          %421 = vmatpush1.msra.mxu0 0.0
          %422 = vmatprep.subr.mxu0 0.0
          %423 = vmatpush1.msra.mxu0 0.0
          %424 = vmatprep.subr.mxu0 0.0
          %425 = vmatpush1.msra.mxu0 0.0
          %426 = vmatprep.subr.mxu0 0.0
          %427 = vmatpush1.msra.mxu0 0.0
          %428 = vmatprep.subr.mxu0 0.0
          %429 = vmatpush1.msra.mxu0 0.0
          %430 = vmatprep.subr.mxu0 0.0
          %431 = vmatpush1.msra.mxu0 0.0
          %432 = vmatprep.subr.mxu0 0.0
          %433 = vmatpush1.msra.mxu0 0.0
          %434 = vmatprep.subr.mxu0 0.0
          %435 = vmatpush1.msra.mxu0 0.0
          %436 = vmatprep.subr.mxu0 0.0
          %437 = vmatpush1.msra.mxu0 0.0
          %438 = vmatprep.mubr.f32.mxu0 0.0
          %439 = vmatmul.mubr.f32.gmra.mrb[0].mxu0 %v369
          %v440 = vpop.f32.mrb[0].mxu0
          %v441 = vadd.f32 0.0, %v440
          %v442 = vpop.f32.mrb[0].mxu0
          %443 = vmatprep.mubr.f32.mxu0 0.0
          %444 = vmatmul.mubr.f32.gmra.mrb[0].mxu0 %v372
          %v445 = vpop.f32.mrb[0].mxu0
          %v446 = vadd.f32 0.0, %v445
          %v447 = vpop.f32.mrb[0].mxu0
          %448 = vdwg.mxu0
          %v449 = vmax.f32 %v319, %v441
          %v450 = vmax.f32 %v320, %v446
          %v451 = vsel %vm362, inf, %v317
          %v452 = vsel %vm363, inf, %v318
        $region37: #{tpu_custom_call.1} parent=31 // loop_footer
          %s316 = sadd.s32 1, %s312
        $region38: #{tpu_custom_call.1} parent=31 // loop_footer_branch
          %311 = sbr.rel target = $region34
        $region39: #{tpu_custom_call.1} parent=31 // loop_exit
          _
        %vm453 = vcmask 261120
        %454 = vst.msk [vmem:[%s216] sm:$0xff] %vm453, %v319
        %455 = vst.msk [vmem:[%s216 + $0x8] sm:$0xff] %vm453, %v320
        %s456 = sand.u32 %s119, 1
        %s457 = scalar_lea.sflag [#allocation3], %s456
        %s458 = sand.u32 %s119, 1
        %s459 = smul.addr %s458, 16
        %s460 = scalar_lea.vmem [#allocation2], %s459
        // Predicated region
        $region40: #{tpu_custom_call.1} parent=31 // pred_check
          %p461 = pneg %p129
        $region41: #{tpu_custom_call.1} parent=31 // pred_check_branch
          %463 = sbr.rel (%p461) target = $region43
        $region42: #{tpu_custom_call.1} parent=31 // pred_region
          %s464 = smul.u32 2, %s22
          %s466 = ssub.s32 256, 256
          %467 = vsyncadd %s457, %s466
          %s468 = smul.addr %s21, 2
          %s469 = sadd.s32 %s464, %s468
          %s470 = smul.addr %s469, 128
          %s471 = scalar_lea.hbm %s3, %s470
          %s472 = sshll.u32 %s460, 4
          %s473 = int_to_ptr.vmem [resolvable:$true] %s472
          %478 = dma.vmem_to_hbm [thread:$0]  %s473, 256, %s471, %s457, 128, 128, 8
        $region43: #{tpu_custom_call.1} parent=31 // pred_fallthru
          _
      $region32: #{tpu_custom_call.1} parent=5 // pred_fallthru
        _
      %p479 = scmp.le.s32.totalorder 2, %s12
      // Predicated region
      $region44: #{tpu_custom_call.1} parent=5 // pred_check
        %p480 = pneg %p479
      $region45: #{tpu_custom_call.1} parent=5 // pred_check_branch
        %482 = sbr.rel (%p480) target = $region47
      $region46: #{tpu_custom_call.1} parent=5 // pred_region
        %s483 = ssub.s32 %s12, 2
        // Predicated region
        $region48: #{tpu_custom_call.1} parent=46 // pred_check
          %p484 = pneg %p135
        $region49: #{tpu_custom_call.1} parent=46 // pred_check_branch
          %486 = sbr.rel (%p484) target = $region51
        $region50: #{tpu_custom_call.1} parent=46 // pred_region
          %s487 = sand.u32 %s120, 1
          %s488 = scalar_lea.sflag [#allocation3], %s487
          %s489 = sand.u32 %s120, 1
          %s490 = smul.addr %s489, 16
          %s491 = scalar_lea.vmem [#allocation2], %s490
          %492 = dma.done %s488, 256
        $region51: #{tpu_custom_call.1} parent=46 // pred_fallthru
          _
      $region47: #{tpu_custom_call.1} parent=5 // pred_fallthru
        _
    $region6: #{tpu_custom_call.1} parent=1 // loop_footer
      %s16 = sadd.s32 1, %s12
    $region7: #{tpu_custom_call.1} parent=1 // loop_footer_branch
      %11 = sbr.rel target = $region3
    $region8: #{tpu_custom_call.1} parent=1 // loop_exit
      _
    %493 = vsyncpa [#allocation3], 1
    %s494 = scalar_lea.sflag [#allocation3], 1
    %495 = vsyncpa %s494, 1

</llo_original>
